<compile_context>
chip_gen: v5e
topology: v5e:2x2
jax: 0.10.0
libtpu: 0.0.40
codegen_flags: <defaults>
</compile_context>

<pallas_src>
import jax
import jax.numpy as jnp
from jax.experimental import pallas as pl
from jax.experimental.pallas import tpu as pltpu


# --------------------------------------------------------------------------
# Kernel: exact identity on the current tile.
# --------------------------------------------------------------------------
def _identity_copy_kernel(x_ref, o_ref):
    o_ref[...] = x_ref[...]


# --------------------------------------------------------------------------
# Tiling policy — the copy is purely HBM-bandwidth bound, so the only levers
# are bytes-per-grid-step, pipeline depth, and VMEM budget.
# --------------------------------------------------------------------------
_TILE_BYTE_BUDGET = 4 * 1024 * 1024   # ~4 MiB/tile: per-step overhead (~0.35 us)
                                      # becomes negligible vs. HBM time.
_VMEM_LIMIT_BYTES = 32 * 1024 * 1024  # explicit scoped-VMEM limit: raises v5e's
                                      # 16 MiB default, matches v6e/v7x default,
                                      # and <=5 live tile buffers * 4 MiB = 20 MiB
                                      # stays well under v7x's 64 MiB physical.


def _choose_row_tile(rows: int, row_bytes: int,
                     budget_bytes: int = _TILE_BYTE_BUDGET) -> int:
    """Row tile for the streamed copy.

    * rows <= 8: use the full dim (block dim == array dim satisfies (8,128)).
    * Otherwise: largest 8-aligned tile within the byte budget, preferring one
      that divides `rows` exactly so every grid step's store is unmasked.
    """
    if rows <= 8:
        return rows
    target = budget_bytes // max(row_bytes, 1)
    target = max(8, (min(target, rows) // 8) * 8)
    # Prefer an 8-aligned tile that divides rows exactly -> no masked tail step.
    for tb in range(target, 7, -8):
        if rows % tb == 0:
            return tb
    return target  # tail step handled correctly by Pallas's masked stores.


# --------------------------------------------------------------------------
# Streamed identity copy (only for the "an op must exist here" case).
# --------------------------------------------------------------------------
def prompt_emb_feat_forward_pallas(x: jax.Array):
    """Pallas identity copy for PromptEmbFeat.forward.

    Prefer the zero-cost pass-through in `PromptEmbFeat.__call__`; use this
    only when an explicit op must anchor the boundary.  For true in-place
    behaviour, call under jax.jit(..., donate_argnums=0).
    """
    B, D = x.shape
    orig_shape = x.shape

    # Lane-dense fold: fewer, wider rows (last dim a large multiple of 128)
    # -> wider unmasked vst and larger contiguous DMA descriptors.
    if B > 8 and B % 8 == 0:
        x2 = x.reshape(B // 8, 8 * D)
    else:
        x2 = x
    R, C = x2.shape

    row_bytes = C * x2.dtype.itemsize
    tb = _choose_row_tile(R, row_bytes)
    n_steps = pl.cdiv(R, tb)

    # Pure copy: a third input buffer keeps more DMAs in flight (there is no
    # compute to hide issue latency behind).  Only worth it with a deep grid.
    if n_steps >= 3:
        in_spec = pl.BlockSpec((tb, C), lambda i: (i, 0),
                               pipeline_mode=pl.Buffered(3))
    else:
        in_spec = pl.BlockSpec((tb, C), lambda i: (i, 0))

    out = pl.pallas_call(
        _identity_copy_kernel,
        out_shape=jax.ShapeDtypeStruct((R, C), x2.dtype),
        grid=(n_steps,),
        in_specs=[in_spec],
        out_specs=pl.BlockSpec((tb, C), lambda i: (i, 0)),
        # Output buffer aliases the input buffer: no second HBM allocation /
        # writeback when the caller donates x.
        input_output_aliases={0: 0},
        compiler_params=pltpu.CompilerParams(
            dimension_semantics=("parallel",),
            vmem_limit_bytes=_VMEM_LIMIT_BYTES,
        ),
        cost_estimate=pl.CostEstimate(
            flops=0,
            transcendentals=0,
            bytes_accessed=2 * R * C * x2.dtype.itemsize,
        ),
    )(x2)
    return out.reshape(orig_shape), None


# --------------------------------------------------------------------------
# Minimal "anchor" op: touch a single (<=8, <=128) tile; the rest of the
# output is carried by the aliased input buffer.  ~1 KiB of HBM traffic.
# --------------------------------------------------------------------------
def prompt_emb_feat_anchor_pallas(x: jax.Array):
    B, D = x.shape
    tb = B if B < 8 else 8      # block dim == full dim or multiple of 8
    tl = D if D < 128 else 128  # block dim == full dim or multiple of 128

    out = pl.pallas_call(
        _identity_copy_kernel,
        out_shape=jax.ShapeDtypeStruct((B, D), x.dtype),
        grid=(1,),
        in_specs=[pl.BlockSpec((tb, tl), lambda i: (0, 0))],
        out_specs=pl.BlockSpec((tb, tl), lambda i: (0, 0)),
        # The untouched region of the output is the aliased input buffer (or
        # XLA's defensive copy of it when x is not donated) -> identity holds
        # either way; donation just makes it free.
        input_output_aliases={0: 0},
        cost_estimate=pl.CostEstimate(
            flops=0,
            transcendentals=0,
            bytes_accessed=2 * tb * tl * x.dtype.itemsize,
        ),
    )(x)
    return out, None


# --------------------------------------------------------------------------
# Module
# --------------------------------------------------------------------------
class PromptEmbFeat:
    """JAX/Pallas port of mineclip PromptEmbFeat: forward(x) == (x, None).

    The fastest "kernel" for a pure pass-through is no kernel: the default
    mode returns x untouched (zero HBM traffic, zero launch overhead).
    """

    # TODO(synk): SentenceTransformer('all-MiniLM-L6-v2').encode() backs only
    # the offline `embed()` method and is not invoked by forward(); it is not
    # reproduced here.

    def __init__(self, output_dim: int, pallas_mode: str = "none"):
        assert pallas_mode in ("none", "copy", "anchor")
        self._output_dim = output_dim
        self._pallas_mode = pallas_mode

    @property
    def output_dim(self):
        return self._output_dim

    def __call__(self, x, **kwargs):
        if self._pallas_mode == "copy":
            return prompt_emb_feat_forward_pallas(x)
        if self._pallas_mode == "anchor":
            return prompt_emb_feat_anchor_pallas(x)
        # Default: pure pass-through — the correct (and optimal) forward.
        return x, None


if __name__ == "__main__":
    key = jax.random.PRNGKey(0)
    k1, k2, k3 = jax.random.split(key, 3)

    B, D = 2, 384  # batch of 2 prompt embeddings, MiniLM dim = 384
    x = jax.random.normal(k1, (B, D), dtype=jnp.float32)

    # 1) Default (recommended) path: zero-cost pass-through.
    module = PromptEmbFeat(output_dim=D)
    out, aux = module(x)
    out = jax.block_until_ready(out)
    assert aux is None
    assert out.shape == x.shape and out.dtype == x.dtype
    assert bool(jnp.allclose(out, x)), "forward must be identity"

    # 2) Streamed Pallas copy, small B (full-dim block path), eager call.
    out_p, aux_p = prompt_emb_feat_forward_pallas(x)
    out_p = jax.block_until_ready(out_p)
    assert aux_p is None
    assert bool(jnp.allclose(out_p, x)), "pallas copy must be identity"

    # 3) Streamed copy with lane-dense fold (B % 8 == 0) and buffer donation
    #    so the output truly reuses the input HBM buffer.
    B2 = 16
    x2 = jax.random.normal(k2, (B2, D), dtype=jnp.float32)
    x2_host = jax.device_get(x2)  # host copy for comparison after donation
    fwd_donated = jax.jit(prompt_emb_feat_forward_pallas, donate_argnums=0)
    out2, aux2 = fwd_donated(x2)
    out2 = jax.block_until_ready(out2)
    assert aux2 is None
    assert out2.shape == (B2, D) and out2.dtype == jnp.float32
    assert bool(jnp.allclose(out2, x2_host)), "tiled pallas copy must be identity"

    # 4) Minimal anchor op: touches one (8,128) tile, rest carried by aliasing.
    B3 = 12  # not a multiple of 8: exercises the partial-coverage + alias path
    x3 = jax.random.normal(k3, (B3, D), dtype=jnp.float32)
    out3, aux3 = prompt_emb_feat_anchor_pallas(x3)
    out3 = jax.block_until_ready(out3)
    assert aux3 is None
    assert bool(jnp.allclose(out3, x3)), "anchor op must be identity"

    print("KERNEL_OK")
</pallas_src>

<mosaic_0001>
module attributes {stable_mosaic.version = 11 : i64} {
  func.func @_identity_copy_kernel(%arg0: i32, %arg1: memref<2x384xf32, #tpu.memory_space<vmem>>, %arg2: memref<2x384xf32, #tpu.memory_space<vmem>>) attributes {dimension_semantics = [#tpu.dimension_semantics<parallel>], iteration_bounds = array<i64: 1>, scalar_prefetch = 0 : i64, scratch_operands = 0 : i64, tpu.core_type = #tpu.core_type<tc>, window_params = [{transform_indices = @transform_0, window_bounds = array<i64: 2, 384>}, {transform_indices = @transform_1, window_bounds = array<i64: 2, 384>}]} {
    %c0 = arith.constant 0 : index
    %c0_0 = arith.constant 0 : index
    %0 = vector.load %arg1[%c0, %c0_0] : memref<2x384xf32, #tpu.memory_space<vmem>>, vector<2x384xf32>
    %c0_1 = arith.constant 0 : index
    %c0_2 = arith.constant 0 : index
    %1 = vector.load %arg2[%c0_1, %c0_2] : memref<2x384xf32, #tpu.memory_space<vmem>>, vector<2x384xf32>
    tpu.vector_store %arg2[%c0_1, %c0_2], %0 {strides = array<i32>} : memref<2x384xf32, #tpu.memory_space<vmem>>, vector<2x384xf32>,
    return
  }
  func.func @transform_0(%arg0: i32) -> (i32, i32) {
    %c0_i32 = arith.constant 0 : i32
    %c0_i32_0 = arith.constant 0 : i32
    return %arg0, %c0_i32 : i32, i32
  }
  func.func @transform_1(%arg0: i32) -> (i32, i32) {
    %c0_i32 = arith.constant 0 : i32
    %c0_i32_0 = arith.constant 0 : i32
    return %arg0, %c0_i32 : i32, i32
  }
}

</mosaic_0001>

<llo_original>
// kernel: tpu_custom_call.1
$region0: #{tpu_custom_call.1}
  #allocation0 [shape = 'u32[]', space=smem, size = 0x4, offset = 0x4, fixed_abs, tag = 'smem constant byte address 0x4 - core index']
  #allocation1 [shape = 'u32[72,128]{1,0:T(1,128)}', space=vmem, size = 0x9000, scoped, tag = 'internal scratch']
  %s0 = inlined_call_operand.hbm [shape: f32[2,384], index: 0, kind: input, shape index: {}, may-alias: {0,1}]
  %s1 = inlined_call_operand.hbm [shape: f32[2,384], index: 1, kind: output, shape index: {}, may-alias: {0,1}]
  %s2 = sld [smem:[#allocation0]]
  $region18: #{tpu_custom_call.1} parent=0
    _
  %s4 = ssub.s32 1, %s2
  %s5 = scalar_select 0, %s4, %s2
  $region1: #{tpu_custom_call.1} parent=0
    #allocation2 [shape = 'u8[3072]{0}', space=vmem, size = 0xc00, scoped, tag = 'input window, operand 0, single buffered']
    #allocation3 [shape = 's32[1]{0}', space=sflag, size = 0x4, scoped, tag = 'scoped memory for tpu_custom_call.1']
    #allocation4 [shape = 's32[1]{0}', space=sflag, size = 0x4, scoped, tag = 'scoped memory for tpu_custom_call.1']
    #allocation5 [shape = 'u8[3072]{0}', space=vmem, size = 0xc00, scoped, tag = 'output window, operand 0, single buffered']
    %6 = vsyncpa [#allocation3], 0
    %7 = vsyncpa [#allocation4], 0
    // Predicated region
    $region2: #{tpu_custom_call.1} parent=1 // pred_check
      _
    $region3: #{tpu_custom_call.1} parent=1 // pred_check_branch
      %9 = sbr.rel (0) target = $region5
    $region4: #{tpu_custom_call.1} parent=1 // pred_region
      %11 = vsyncadd [#allocation3], 0
      %s13 = sshll.u32 %s0, 4
      %s14 = int_to_ptr.hbm [resolvable:$true] %s13
      %s15 = sshll.u32 [#allocation2], 4
      %s16 = int_to_ptr.vmem [resolvable:$true] %s15
      %18 = dma.hbm_to_vmem [thread:$0]  %s14, 96, %s16, [#allocation3]
    $region5: #{tpu_custom_call.1} parent=1 // pred_fallthru
      _
    // Predicated region
    $region6: #{tpu_custom_call.1} parent=1 // pred_check
      _
    $region7: #{tpu_custom_call.1} parent=1 // pred_check_branch
      %20 = sbr.rel (0) target = $region9
    $region8: #{tpu_custom_call.1} parent=1 // pred_region
      %22 = dma.done [#allocation3], 96
    $region9: #{tpu_custom_call.1} parent=1 // pred_fallthru
      _
    %v23 = vld [vmem:[#allocation2] sm:$0x3f]
    %24 = vst [vmem:[#allocation5] sm:$0x3f] %v23
    // Predicated region
    $region10: #{tpu_custom_call.1} parent=1 // pred_check
      _
    $region11: #{tpu_custom_call.1} parent=1 // pred_check_branch
      %26 = sbr.rel (0) target = $region13
    $region12: #{tpu_custom_call.1} parent=1 // pred_region
      %28 = vsyncadd [#allocation4], 0
      %s30 = sshll.u32 [#allocation5], 4
      %s31 = int_to_ptr.vmem [resolvable:$true] %s30
      %s32 = sshll.u32 %s1, 4
      %s33 = int_to_ptr.hbm [resolvable:$true] %s32
      %35 = dma.vmem_to_hbm [thread:$0]  %s31, 96, %s33, [#allocation4]
    $region13: #{tpu_custom_call.1} parent=1 // pred_fallthru
      _
    // Predicated region
    $region14: #{tpu_custom_call.1} parent=1 // pred_check
      _
    $region15: #{tpu_custom_call.1} parent=1 // pred_check_branch
      %37 = sbr.rel (0) target = $region17
    $region16: #{tpu_custom_call.1} parent=1 // pred_region
      %39 = dma.done [#allocation4], 96
    $region17: #{tpu_custom_call.1} parent=1 // pred_fallthru
      _
    %40 = vsyncpa [#allocation3], 1
    %41 = vsyncpa [#allocation4], 1

</llo_original>
